<compile_context>
chip_gen: v7x
topology: tpu7x:2x2x1
jax: 0.10.0
libtpu: 0.0.40
codegen_flags: <defaults>
</compile_context>

<pallas_src>
import jax
import jax.numpy as jnp
from jax.experimental import pallas as pl
from jax.experimental.pallas import tpu as pltpu


def _top_kernel(x_ref, w_ref, wf_ref, bias_ref, out_ref):
    """One batch tile: full contributor reduction + final projection + sigmoid.

    x_ref:    (n_used, TB, 64)  contributor activations (batch tile)
    w_ref:    (n_used, 64, 64)  torch-layout Linear weights (out, in), resident
    wf_ref:   (64, 1)           final Linear weight as a column
    bias_ref: (1, 1)            combined scalar bias = final_w @ sum(b_k) + final_b
    out_ref:  (1, TB)           sigmoid probabilities, batch on the lane axis
    """
    n_used = x_ref.shape[0]

    # acc = agg.T = sum_k  W_k @ x_k.T   -> (64, TB), feature-major so the
    # epilogue and the output store are lane-dense along the batch dimension.
    acc = jax.lax.dot_general(
        w_ref[0], x_ref[0],
        dimension_numbers=(((1,), (1,)), ((), ())),
        preferred_element_type=jnp.float32)
    for k in range(1, n_used):                 # static unroll; n_used is tiny
        acc = acc + jax.lax.dot_general(
            w_ref[k], x_ref[k],
            dimension_numbers=(((1,), (1,)), ((), ())),
            preferred_element_type=jnp.float32)

    # Final 64 -> 1 projection as VPU multiply + cross-sublane reduce
    # (avoids a degenerate N=1 MXU pass); biases folded into one scalar.
    logits = jnp.sum(acc * wf_ref[...], axis=0, keepdims=True) + bias_ref[0, 0]
    out_ref[...] = jax.nn.sigmoid(logits).astype(out_ref.dtype)


def simple_linear_top(x, contrib_w, contrib_b, final_w, final_b, *, block_b=1024):
    """x: (world_size, B, 64) f32
    contrib_w: (world_size, 64, 64)  torch-layout (out, in)
    contrib_b: (world_size, 64)
    final_w:   (1, 64)  torch-layout (out, in)
    final_b:   (1,)
    returns sigmoid probabilities, shaped like torch's `.squeeze()` of (B, 1).
    """
    world_size, B, D = x.shape
    assert D == 64, "SimpleLinearTop is a 64-feature model"
    n_used = world_size - 1 if world_size >= 2 else 1   # PyTorch loop quirk

    # Tiny (O(64)-element) wrapper-side prep; x and contrib_w go to the kernel
    # untouched and are sliced purely via the BlockSpec index maps.
    wf_col = final_w.reshape(D, 1).astype(jnp.float32)                    # (64, 1)
    bias = (jnp.sum(final_w[0] * jnp.sum(contrib_b[:n_used], axis=0))
            + final_b[0]).reshape(1, 1).astype(jnp.float32)               # (1, 1)

    tb = B if B <= block_b else block_b        # batch tile (lane-dense output)
    nb = pl.cdiv(B, tb)

    out = pl.pallas_call(
        _top_kernel,
        out_shape=jax.ShapeDtypeStruct((1, B), jnp.float32),
        grid_spec=pltpu.PrefetchScalarGridSpec(
            num_scalar_prefetch=0,
            grid=(nb,),
            in_specs=[
                # block index 0 on the contributor axis selects rows 0..n_used-1
                pl.BlockSpec((n_used, tb, D), lambda i: (0, i, 0)),   # x tile
                pl.BlockSpec((n_used, D, D), lambda i: (0, 0, 0)),    # W (resident)
                pl.BlockSpec((D, 1), lambda i: (0, 0)),               # final W col
                pl.BlockSpec((1, 1), lambda i: (0, 0)),               # fused bias
            ],
            out_specs=pl.BlockSpec((1, tb), lambda i: (0, i)),
        ),
        compiler_params=pltpu.CompilerParams(
            dimension_semantics=("parallel",)),   # batch axis; megacore split
    )(x, contrib_w, wf_col, bias)

    # torch's .squeeze(): (B,) for B > 1, 0-d scalar for B == 1.
    return jnp.squeeze(out)


def _xavier_uniform(key, shape):
    # torch.nn.init.xavier_uniform_ on a (fan_out, fan_in) Linear weight
    fan_out, fan_in = shape
    a = jnp.sqrt(6.0 / (fan_in + fan_out))
    return jax.random.uniform(key, shape, jnp.float32, minval=-a, maxval=a)


def init_params(key, world_size):
    keys = jax.random.split(key, world_size + 1)
    contrib_w = jnp.stack(
        [_xavier_uniform(keys[i], (64, 64)) for i in range(world_size)])  # (W,64,64)
    contrib_b = jnp.full((world_size, 64), 0.01, jnp.float32)
    final_w = _xavier_uniform(keys[world_size], (1, 64))                  # (1,64)
    final_b = jnp.full((1,), 0.01, jnp.float32)
    return contrib_w, contrib_b, final_w, final_b


def _reference(x, contrib_w, contrib_b, final_w, final_b):
    world_size = x.shape[0]
    agg = x[0] @ contrib_w[0].T + contrib_b[0]
    for i in range(1, world_size - 1):
        agg = agg + x[i] @ contrib_w[i].T + contrib_b[i]
    return jax.nn.sigmoid(agg @ final_w.T + final_b)[:, 0]


if __name__ == "__main__":
    world_size = 3
    batch = 8
    key = jax.random.PRNGKey(0)
    k_x, k_p = jax.random.split(key)

    x = jax.random.normal(k_x, (world_size, batch, 64), jnp.float32)
    contrib_w, contrib_b, final_w, final_b = init_params(k_p, world_size)

    out = simple_linear_top(x, contrib_w, contrib_b, final_w, final_b)
    out = jax.block_until_ready(out)

    ref = _reference(x, contrib_w, contrib_b, final_w, final_b)
    assert out.shape == (batch,), out.shape
    assert jnp.allclose(out, ref, atol=1e-5, rtol=1e-5), (out, ref)

    print("KERNEL_OK")
</pallas_src>

<mosaic_0001>
module attributes {stable_mosaic.version = 11 : i64} {
  func.func @_top_kernel(%arg0: i32, %arg1: memref<2x8x64xf32, #tpu.memory_space<vmem>>, %arg2: memref<2x64x64xf32, #tpu.memory_space<vmem>>, %arg3: memref<64x1xf32, #tpu.memory_space<vmem>>, %arg4: memref<1x1xf32, #tpu.memory_space<vmem>>, %arg5: memref<1x8xf32, #tpu.memory_space<vmem>>) attributes {dimension_semantics = [#tpu.dimension_semantics<parallel>], iteration_bounds = array<i64: 1>, scalar_prefetch = 0 : i64, scratch_operands = 0 : i64, tpu.core_type = #tpu.core_type<tc>, window_params = [{transform_indices = @transform_0, window_bounds = array<i64: 2, 8, 64>}, {transform_indices = @transform_1, window_bounds = array<i64: 2, 64, 64>}, {pipeline_mode = #tpu.pipeline_mode<synchronous>, transform_indices = @transform_2, window_bounds = array<i64: 64, 1>}, {pipeline_mode = #tpu.pipeline_mode<synchronous>, transform_indices = @transform_3, window_bounds = array<i64: 1, 1>}, {transform_indices = @transform_4, window_bounds = array<i64: 1, 8>}]} {
    %c0 = arith.constant 0 : index
    %c0_0 = arith.constant 0 : index
    %c0_1 = arith.constant 0 : index
    %0 = vector.load %arg2[%c0, %c0_0, %c0_1] : memref<2x64x64xf32, #tpu.memory_space<vmem>>, vector<1x64x64xf32>
    %1 = vector.shape_cast %0 : vector<1x64x64xf32> to vector<64x64xf32>
    %c0_2 = arith.constant 0 : index
    %c0_3 = arith.constant 0 : index
    %c0_4 = arith.constant 0 : index
    %2 = vector.load %arg1[%c0_2, %c0_3, %c0_4] : memref<2x8x64xf32, #tpu.memory_space<vmem>>, vector<1x8x64xf32>
    %3 = vector.shape_cast %2 : vector<1x8x64xf32> to vector<8x64xf32>
    %cst = arith.constant dense<0.000000e+00> : vector<64x8xf32>
    %4 = tpu.matmul %1, %3, %cst {dimension_numbers = #tpu.dot_dimension_numbers<[1], [1], [0], [0], [0, 0, 1, 0], [], []>} : vector<64x64xf32>, vector<8x64xf32>, vector<64x8xf32> -> vector<64x8xf32>
    %c1 = arith.constant 1 : index
    %c0_5 = arith.constant 0 : index
    %c0_6 = arith.constant 0 : index
    %5 = vector.load %arg2[%c1, %c0_5, %c0_6] : memref<2x64x64xf32, #tpu.memory_space<vmem>>, vector<1x64x64xf32>
    %6 = vector.shape_cast %5 : vector<1x64x64xf32> to vector<64x64xf32>
    %c1_7 = arith.constant 1 : index
    %c0_8 = arith.constant 0 : index
    %c0_9 = arith.constant 0 : index
    %7 = vector.load %arg1[%c1_7, %c0_8, %c0_9] : memref<2x8x64xf32, #tpu.memory_space<vmem>>, vector<1x8x64xf32>
    %8 = vector.shape_cast %7 : vector<1x8x64xf32> to vector<8x64xf32>
    %cst_10 = arith.constant dense<0.000000e+00> : vector<64x8xf32>
    %9 = tpu.matmul %6, %8, %cst_10 {dimension_numbers = #tpu.dot_dimension_numbers<[1], [1], [0], [0], [0, 0, 1, 0], [], []>} : vector<64x64xf32>, vector<8x64xf32>, vector<64x8xf32> -> vector<64x8xf32>
    %10 = arith.addf %4, %9 : vector<64x8xf32>
    %c0_11 = arith.constant 0 : index
    %c0_12 = arith.constant 0 : index
    %11 = vector.load %arg3[%c0_11, %c0_12] : memref<64x1xf32, #tpu.memory_space<vmem>>, vector<64x1xf32>
    %12 = vector.broadcast %11 : vector<64x1xf32> to vector<64x8xf32>
    %13 = arith.mulf %10, %12 : vector<64x8xf32>
    %cst_13 = arith.constant dense<0.000000e+00> : vector<8xf32>
    %14 = vector.multi_reduction <add>, %13, %cst_13 [0] : vector<64x8xf32> to vector<8xf32>
    %15 = vector.shape_cast %14 : vector<8xf32> to vector<1x8xf32>
    %c0_14 = arith.constant 0 : index
    %c0_15 = arith.constant 0 : index
    %16 = vector.load %arg4[%c0_14, %c0_15] : memref<1x1xf32, #tpu.memory_space<vmem>>, vector<1x1xf32>
    %17 = vector.extract %16[0, 0] : f32 from vector<1x1xf32>
    %18 = vector.broadcast %17 : f32 to vector<1x8xf32>
    %19 = arith.addf %15, %18 : vector<1x8xf32>
    %20 = arith.negf %19 : vector<1x8xf32>
    %21 = math.exp %20 : vector<1x8xf32>
    %cst_16 = arith.constant 1.000000e+00 : f32
    %22 = vector.broadcast %cst_16 : f32 to vector<1x8xf32>
    %23 = arith.addf %22, %21 : vector<1x8xf32>
    %24 = arith.divf %22, %23 : vector<1x8xf32>
    %c0_17 = arith.constant 0 : index
    %c0_18 = arith.constant 0 : index
    %25 = vector.load %arg5[%c0_17, %c0_18] : memref<1x8xf32, #tpu.memory_space<vmem>>, vector<1x8xf32>
    tpu.vector_store %arg5[%c0_17, %c0_18], %24 {strides = array<i32>} : memref<1x8xf32, #tpu.memory_space<vmem>>, vector<1x8xf32>,
    return
  }
  func.func @transform_0(%arg0: i32) -> (i32, i32, i32) {
    %c0_i32 = arith.constant 0 : i32
    %c0_i32_0 = arith.constant 0 : i32
    %c0_i32_1 = arith.constant 0 : i32
    return %c0_i32, %arg0, %c0_i32_0 : i32, i32, i32
  }
  func.func @transform_1(%arg0: i32) -> (i32, i32, i32) {
    %c0_i32 = arith.constant 0 : i32
    %c0_i32_0 = arith.constant 0 : i32
    %c0_i32_1 = arith.constant 0 : i32
    %c0_i32_2 = arith.constant 0 : i32
    return %c0_i32, %c0_i32_0, %c0_i32_1 : i32, i32, i32
  }
  func.func @transform_2(%arg0: i32) -> (i32, i32) {
    %c0_i32 = arith.constant 0 : i32
    %c0_i32_0 = arith.constant 0 : i32
    %c0_i32_1 = arith.constant 0 : i32
    return %c0_i32, %c0_i32_0 : i32, i32
  }
  func.func @transform_3(%arg0: i32) -> (i32, i32) {
    %c0_i32 = arith.constant 0 : i32
    %c0_i32_0 = arith.constant 0 : i32
    %c0_i32_1 = arith.constant 0 : i32
    return %c0_i32, %c0_i32_0 : i32, i32
  }
  func.func @transform_4(%arg0: i32) -> (i32, i32) {
    %c0_i32 = arith.constant 0 : i32
    %c0_i32_0 = arith.constant 0 : i32
    return %c0_i32, %arg0 : i32, i32
  }
}

</mosaic_0001>

<llo_original>
// kernel: tpu_custom_call.1
$region0: #{tpu_custom_call.1}
  #allocation0 [shape = 'u32[]', space=smem, size = 0x4, offset = 0x4, fixed_abs, tag = 'smem constant byte address 0x4 - core index']
  #allocation1 [shape = 'u32[144,128]{1,0:T(1,128)}', space=vmem, size = 0x12000, scoped, tag = 'internal scratch']
  #allocation2 [shape = 'f32[1,1]{1,0:T(1,128)S(1)}', space=vmem, size = 0x200, scoped, tag = 'scoped memory for tpu_custom_call.1']
  %s0 = inlined_call_operand.vmem [shape: f32[3,8,64], index: 0, kind: input, shape index: {}]
  %s1 = inlined_call_operand.hbm [shape: f32[3,64,64], index: 1, kind: input, shape index: {}]
  %s2 = inlined_call_operand.vmem [shape: f32[64,1], index: 2, kind: input, shape index: {}]
  %s3 = inlined_call_operand.<no memory space> [shape: f32[1,1], index: 3, kind: input, shape index: {}]
  %s4 = inlined_call_operand.hbm [shape: f32[1,8], index: 4, kind: output, shape index: {}]
  %s5 = sld [smem:[#allocation0]]
  $region30: #{tpu_custom_call.1} parent=0
    _
  %s7 = ssub.s32 1, %s5
  %s8 = scalar_select 0, %s7, %s5
  %v9 = vstv %s3
  %10 = vst [vmem:[#allocation2] sm:$0x1] %v9
  $region1: #{tpu_custom_call.1} parent=0
    #allocation3 [shape = 'u8[65536]{0}', space=vmem, size = 0x10000, scoped, tag = 'input window, operand 1, single buffered']
    #allocation4 [shape = 's32[1]{0}', space=sflag, size = 0x4, scoped, tag = 'scoped memory for tpu_custom_call.1']
    #allocation5 [shape = 's32[1]{0}', space=sflag, size = 0x4, scoped, tag = 'scoped memory for tpu_custom_call.1']
    #allocation6 [shape = 'u8[512]{0}', space=vmem, size = 0x400, scoped, tag = 'output window, operand 0, single buffered']
    %11 = vsyncpa [#allocation4], 0
    %12 = vsyncpa [#allocation5], 0
    // Predicated region
    $region2: #{tpu_custom_call.1} parent=1 // pred_check
      _
    $region3: #{tpu_custom_call.1} parent=1 // pred_check_branch
      %14 = sbr.rel (0) target = $region5
    $region4: #{tpu_custom_call.1} parent=1 // pred_region
      _
    $region5: #{tpu_custom_call.1} parent=1 // pred_fallthru
      _
    // Predicated region
    $region6: #{tpu_custom_call.1} parent=1 // pred_check
      _
    $region7: #{tpu_custom_call.1} parent=1 // pred_check_branch
      %16 = sbr.rel (0) target = $region9
    $region8: #{tpu_custom_call.1} parent=1 // pred_region
      %s18 = ssub.s32 2048, 2048
      %19 = vsyncadd [#allocation4], %s18
      %s20 = sshll.u32 [#allocation3], 4
      %s21 = int_to_ptr.vmem [resolvable:$true] %s20
      %26 = dma.hbm_to_vmem [thread:$0]  %s1, 2048, %s21, [#allocation4], 128, 128, 8
    $region9: #{tpu_custom_call.1} parent=1 // pred_fallthru
      _
    // Predicated region
    $region10: #{tpu_custom_call.1} parent=1 // pred_check
      _
    $region11: #{tpu_custom_call.1} parent=1 // pred_check_branch
      %28 = sbr.rel (0) target = $region13
    $region12: #{tpu_custom_call.1} parent=1 // pred_region
      _
    $region13: #{tpu_custom_call.1} parent=1 // pred_fallthru
      _
    // Predicated region
    $region14: #{tpu_custom_call.1} parent=1 // pred_check
      _
    $region15: #{tpu_custom_call.1} parent=1 // pred_check_branch
      %30 = sbr.rel (0) target = $region17
    $region16: #{tpu_custom_call.1} parent=1 // pred_region
      _
    $region17: #{tpu_custom_call.1} parent=1 // pred_fallthru
      _
    // Predicated region
    $region18: #{tpu_custom_call.1} parent=1 // pred_check
      _
    $region19: #{tpu_custom_call.1} parent=1 // pred_check_branch
      %32 = sbr.rel (0) target = $region21
    $region20: #{tpu_custom_call.1} parent=1 // pred_region
      %33 = dma.done [#allocation4], 2048
    $region21: #{tpu_custom_call.1} parent=1 // pred_fallthru
      _
    %v34 = vld [vmem:[#allocation3] sm:$0xff]
    %v35 = vld [vmem:[#allocation3 + $0x8] sm:$0xff]
    %v36 = vld [vmem:[#allocation3 + $0x10] sm:$0xff]
    %v37 = vld [vmem:[#allocation3 + $0x18] sm:$0xff]
    %v38 = vld [vmem:[#allocation3 + $0x20] sm:$0xff]
    %v39 = vld [vmem:[#allocation3 + $0x28] sm:$0xff]
    %v40 = vld [vmem:[#allocation3 + $0x30] sm:$0xff]
    %v41 = vld [vmem:[#allocation3 + $0x38] sm:$0xff]
    %v42 = vld [vmem:[%s0] sm:$0xff]
    %s43 = scalar_lea.vmem [#allocation3], 64
    %v44 = vld [vmem:[%s43] sm:$0xff]
    %v45 = vld [vmem:[%s43 + $0x8] sm:$0xff]
    %v46 = vld [vmem:[%s43 + $0x10] sm:$0xff]
    %v47 = vld [vmem:[%s43 + $0x18] sm:$0xff]
    %v48 = vld [vmem:[%s43 + $0x20] sm:$0xff]
    %v49 = vld [vmem:[%s43 + $0x28] sm:$0xff]
    %v50 = vld [vmem:[%s43 + $0x30] sm:$0xff]
    %v51 = vld [vmem:[%s43 + $0x38] sm:$0xff]
    %s52 = scalar_lea.vmem %s0, 8
    %v53 = vld [vmem:[%s52] sm:$0xff]
    %vm54 = vcmask 523264
    %v56 = vsel %vm54, %v44, 0
    %v59 = vsel %vm54, %v45, 0
    %v62 = vsel %vm54, %v46, 0
    %v65 = vsel %vm54, %v47, 0
    %v68 = vsel %vm54, %v48, 0
    %v71 = vsel %vm54, %v49, 0
    %v74 = vsel %vm54, %v50, 0
    %v77 = vsel %vm54, %v51, 0
    %v80 = vsel %vm54, %v53, 0
    %82 = vmatprep.subr.mxu0 0.0
    %83 = vmatpush1.xpose.msra.mxu0 %v80
    %84 = vmatprep.subr.mxu0 0.0
    %85 = vmatpush1.xpose.msra.mxu0 0.0
    %86 = vmatprep.subr.mxu0 0.0
    %87 = vmatpush1.xpose.msra.mxu0 0.0
    %88 = vmatprep.subr.mxu0 0.0
    %89 = vmatpush1.xpose.msra.mxu0 0.0
    %90 = vmatprep.subr.mxu0 0.0
    %91 = vmatpush1.xpose.msra.mxu0 0.0
    %92 = vmatprep.subr.mxu0 0.0
    %93 = vmatpush1.xpose.msra.mxu0 0.0
    %94 = vmatprep.subr.mxu0 0.0
    %95 = vmatpush1.xpose.msra.mxu0 0.0
    %96 = vmatprep.subr.mxu0 0.0
    %97 = vmatpush1.xpose.msra.mxu0 0.0
    %98 = vmatprep.subr.mxu0 0.0
    %99 = vmatpush1.xpose.msra.mxu0 0.0
    %100 = vmatprep.subr.mxu0 0.0
    %101 = vmatpush1.xpose.msra.mxu0 0.0
    %102 = vmatprep.subr.mxu0 0.0
    %103 = vmatpush1.xpose.msra.mxu0 0.0
    %104 = vmatprep.subr.mxu0 0.0
    %105 = vmatpush1.xpose.msra.mxu0 0.0
    %106 = vmatprep.subr.mxu0 0.0
    %107 = vmatpush1.xpose.msra.mxu0 0.0
    %108 = vmatprep.subr.mxu0 0.0
    %109 = vmatpush1.xpose.msra.mxu0 0.0
    %110 = vmatprep.subr.mxu0 0.0
    %111 = vmatpush1.xpose.msra.mxu0 0.0
    %112 = vmatprep.subr.mxu0 0.0
    %113 = vmatpush1.xpose.msra.mxu0 0.0
    %114 = vmatprep.subr.mxu0 0.0
    %115 = vmatpush1.xpose.msra.mxu0 0.0
    %116 = vmatprep.subr.mxu0 0.0
    %117 = vmatpush1.xpose.msra.mxu0 0.0
    %118 = vmatprep.subr.mxu0 0.0
    %119 = vmatpush1.xpose.msra.mxu0 0.0
    %120 = vmatprep.subr.mxu0 0.0
    %121 = vmatpush1.xpose.msra.mxu0 0.0
    %122 = vmatprep.subr.mxu0 0.0
    %123 = vmatpush1.xpose.msra.mxu0 0.0
    %124 = vmatprep.subr.mxu0 0.0
    %125 = vmatpush1.xpose.msra.mxu0 0.0
    %126 = vmatprep.subr.mxu0 0.0
    %127 = vmatpush1.xpose.msra.mxu0 0.0
    %128 = vmatprep.subr.mxu0 0.0
    %129 = vmatpush1.xpose.msra.mxu0 0.0
    %130 = vmatprep.subr.mxu0 0.0
    %131 = vmatpush1.xpose.msra.mxu0 0.0
    %132 = vmatprep.subr.mxu0 0.0
    %133 = vmatpush1.xpose.msra.mxu0 0.0
    %134 = vmatprep.subr.mxu0 0.0
    %135 = vmatpush1.xpose.msra.mxu0 0.0
    %136 = vmatprep.subr.mxu0 0.0
    %137 = vmatpush1.xpose.msra.mxu0 0.0
    %138 = vmatprep.subr.mxu0 0.0
    %139 = vmatpush1.xpose.msra.mxu0 0.0
    %140 = vmatprep.subr.mxu0 0.0
    %141 = vmatpush1.xpose.msra.mxu0 0.0
    %142 = vmatprep.subr.mxu0 0.0
    %143 = vmatpush1.xpose.msra.mxu0 0.0
    %144 = vmatprep.subr.mxu0 0.0
    %145 = vmatpush1.xpose.msra.mxu0 0.0
    %146 = vmatprep.mubr.f32.mxu0 0.0
    %147 = vmatmul.mubr.f32.gmra.mrb[0].mxu0 %v56
    %v148 = vpop.f32.mrb[0].mxu0
    %v149 = vadd.f32 0.0, %v148
    %v150 = vpop.f32.mrb[0].mxu0
    %151 = vmatprep.mubr.f32.mxu0 0.0
    %152 = vmatmul.mubr.f32.gmra.mrb[0].mxu0 %v59
    %v153 = vpop.f32.mrb[0].mxu0
    %v154 = vadd.f32 0.0, %v153
    %v155 = vpop.f32.mrb[0].mxu0
    %156 = vmatprep.mubr.f32.mxu0 0.0
    %157 = vmatmul.mubr.f32.gmra.mrb[0].mxu0 %v62
    %v158 = vpop.f32.mrb[0].mxu0
    %v159 = vadd.f32 0.0, %v158
    %v160 = vpop.f32.mrb[0].mxu0
    %161 = vmatprep.mubr.f32.mxu0 0.0
    %162 = vmatmul.mubr.f32.gmra.mrb[0].mxu0 %v65
    %v163 = vpop.f32.mrb[0].mxu0
    %v164 = vadd.f32 0.0, %v163
    %v165 = vpop.f32.mrb[0].mxu0
    %166 = vmatprep.mubr.f32.mxu0 0.0
    %167 = vmatmul.mubr.f32.gmra.mrb[0].mxu0 %v68
    %v168 = vpop.f32.mrb[0].mxu0
    %v169 = vadd.f32 0.0, %v168
    %v170 = vpop.f32.mrb[0].mxu0
    %171 = vmatprep.mubr.f32.mxu0 0.0
    %172 = vmatmul.mubr.f32.gmra.mrb[0].mxu0 %v71
    %v173 = vpop.f32.mrb[0].mxu0
    %v174 = vadd.f32 0.0, %v173
    %v175 = vpop.f32.mrb[0].mxu0
    %176 = vmatprep.mubr.f32.mxu0 0.0
    %177 = vmatmul.mubr.f32.gmra.mrb[0].mxu0 %v74
    %v178 = vpop.f32.mrb[0].mxu0
    %v179 = vadd.f32 0.0, %v178
    %v180 = vpop.f32.mrb[0].mxu0
    %181 = vmatprep.mubr.f32.mxu0 0.0
    %182 = vmatmul.mubr.f32.gmra.mrb[0].mxu0 %v77
    %v183 = vpop.f32.mrb[0].mxu0
    %v184 = vadd.f32 0.0, %v183
    %v185 = vpop.f32.mrb[0].mxu0
    %186 = vdwg.mxu0
    %v188 = vsel %vm54, %v34, 0
    %v191 = vsel %vm54, %v35, 0
    %v194 = vsel %vm54, %v36, 0
    %v197 = vsel %vm54, %v37, 0
    %v200 = vsel %vm54, %v38, 0
    %v203 = vsel %vm54, %v39, 0
    %v206 = vsel %vm54, %v40, 0
    %v209 = vsel %vm54, %v41, 0
    %v212 = vsel %vm54, %v42, 0
    %214 = vmatprep.subr.mxu0 0.0
    %215 = vmatpush1.xpose.msra.mxu0 %v212
    %216 = vmatprep.subr.mxu0 0.0
    %217 = vmatpush1.xpose.msra.mxu0 0.0
    %218 = vmatprep.subr.mxu0 0.0
    %219 = vmatpush1.xpose.msra.mxu0 0.0
    %220 = vmatprep.subr.mxu0 0.0
    %221 = vmatpush1.xpose.msra.mxu0 0.0
    %222 = vmatprep.subr.mxu0 0.0
    %223 = vmatpush1.xpose.msra.mxu0 0.0
    %224 = vmatprep.subr.mxu0 0.0
    %225 = vmatpush1.xpose.msra.mxu0 0.0
    %226 = vmatprep.subr.mxu0 0.0
    %227 = vmatpush1.xpose.msra.mxu0 0.0
    %228 = vmatprep.subr.mxu0 0.0
    %229 = vmatpush1.xpose.msra.mxu0 0.0
    %230 = vmatprep.subr.mxu0 0.0
    %231 = vmatpush1.xpose.msra.mxu0 0.0
    %232 = vmatprep.subr.mxu0 0.0
    %233 = vmatpush1.xpose.msra.mxu0 0.0
    %234 = vmatprep.subr.mxu0 0.0
    %235 = vmatpush1.xpose.msra.mxu0 0.0
    %236 = vmatprep.subr.mxu0 0.0
    %237 = vmatpush1.xpose.msra.mxu0 0.0
    %238 = vmatprep.subr.mxu0 0.0
    %239 = vmatpush1.xpose.msra.mxu0 0.0
    %240 = vmatprep.subr.mxu0 0.0
    %241 = vmatpush1.xpose.msra.mxu0 0.0
    %242 = vmatprep.subr.mxu0 0.0
    %243 = vmatpush1.xpose.msra.mxu0 0.0
    %244 = vmatprep.subr.mxu0 0.0
    %245 = vmatpush1.xpose.msra.mxu0 0.0
    %246 = vmatprep.subr.mxu0 0.0
    %247 = vmatpush1.xpose.msra.mxu0 0.0
    %248 = vmatprep.subr.mxu0 0.0
    %249 = vmatpush1.xpose.msra.mxu0 0.0
    %250 = vmatprep.subr.mxu0 0.0
    %251 = vmatpush1.xpose.msra.mxu0 0.0
    %252 = vmatprep.subr.mxu0 0.0
    %253 = vmatpush1.xpose.msra.mxu0 0.0
    %254 = vmatprep.subr.mxu0 0.0
    %255 = vmatpush1.xpose.msra.mxu0 0.0
    %256 = vmatprep.subr.mxu0 0.0
    %257 = vmatpush1.xpose.msra.mxu0 0.0
    %258 = vmatprep.subr.mxu0 0.0
    %259 = vmatpush1.xpose.msra.mxu0 0.0
    %260 = vmatprep.subr.mxu0 0.0
    %261 = vmatpush1.xpose.msra.mxu0 0.0
    %262 = vmatprep.subr.mxu0 0.0
    %263 = vmatpush1.xpose.msra.mxu0 0.0
    %264 = vmatprep.subr.mxu0 0.0
    %265 = vmatpush1.xpose.msra.mxu0 0.0
    %266 = vmatprep.subr.mxu0 0.0
    %267 = vmatpush1.xpose.msra.mxu0 0.0
    %268 = vmatprep.subr.mxu0 0.0
    %269 = vmatpush1.xpose.msra.mxu0 0.0
    %270 = vmatprep.subr.mxu0 0.0
    %271 = vmatpush1.xpose.msra.mxu0 0.0
    %272 = vmatprep.subr.mxu0 0.0
    %273 = vmatpush1.xpose.msra.mxu0 0.0
    %274 = vmatprep.subr.mxu0 0.0
    %275 = vmatpush1.xpose.msra.mxu0 0.0
    %276 = vmatprep.subr.mxu0 0.0
    %277 = vmatpush1.xpose.msra.mxu0 0.0
    %278 = vmatprep.mubr.f32.mxu0 0.0
    %279 = vmatmul.mubr.f32.gmra.mrb[0].mxu0 %v188
    %v280 = vpop.f32.mrb[0].mxu0
    %v281 = vadd.f32 %v149, %v280
    %v282 = vpop.f32.mrb[0].mxu0
    %283 = vmatprep.mubr.f32.mxu0 0.0
    %284 = vmatmul.mubr.f32.gmra.mrb[0].mxu0 %v191
    %v285 = vpop.f32.mrb[0].mxu0
    %v286 = vadd.f32 %v154, %v285
    %v287 = vpop.f32.mrb[0].mxu0
    %288 = vmatprep.mubr.f32.mxu0 0.0
    %289 = vmatmul.mubr.f32.gmra.mrb[0].mxu0 %v194
    %v290 = vpop.f32.mrb[0].mxu0
    %v291 = vadd.f32 %v159, %v290
    %v292 = vpop.f32.mrb[0].mxu0
    %293 = vmatprep.mubr.f32.mxu0 0.0
    %294 = vmatmul.mubr.f32.gmra.mrb[0].mxu0 %v197
    %v295 = vpop.f32.mrb[0].mxu0
    %v296 = vadd.f32 %v164, %v295
    %v297 = vpop.f32.mrb[0].mxu0
    %298 = vmatprep.mubr.f32.mxu0 0.0
    %299 = vmatmul.mubr.f32.gmra.mrb[0].mxu0 %v200
    %v300 = vpop.f32.mrb[0].mxu0
    %v301 = vadd.f32 %v169, %v300
    %v302 = vpop.f32.mrb[0].mxu0
    %303 = vmatprep.mubr.f32.mxu0 0.0
    %304 = vmatmul.mubr.f32.gmra.mrb[0].mxu0 %v203
    %v305 = vpop.f32.mrb[0].mxu0
    %v306 = vadd.f32 %v174, %v305
    %v307 = vpop.f32.mrb[0].mxu0
    %308 = vmatprep.mubr.f32.mxu0 0.0
    %309 = vmatmul.mubr.f32.gmra.mrb[0].mxu0 %v206
    %v310 = vpop.f32.mrb[0].mxu0
    %v311 = vadd.f32 %v179, %v310
    %v312 = vpop.f32.mrb[0].mxu0
    %313 = vmatprep.mubr.f32.mxu0 0.0
    %314 = vmatmul.mubr.f32.gmra.mrb[0].mxu0 %v209
    %v315 = vpop.f32.mrb[0].mxu0
    %v316 = vadd.f32 %v184, %v315
    %v317 = vpop.f32.mrb[0].mxu0
    %318 = vdwg.mxu0
    %v319 = vld [vmem:[%s2] sm:$0xff]
    %v320 = vld [vmem:[%s2 + $0x8] sm:$0xff]
    %v321 = vld [vmem:[%s2 + $0x10] sm:$0xff]
    %v322 = vld [vmem:[%s2 + $0x18] sm:$0xff]
    %v323 = vld [vmem:[%s2 + $0x20] sm:$0xff]
    %v324 = vld [vmem:[%s2 + $0x28] sm:$0xff]
    %v325 = vld [vmem:[%s2 + $0x30] sm:$0xff]
    %v326 = vld [vmem:[%s2 + $0x38] sm:$0xff]
    %328 = vset.pattern.permute.xlu0 0
    %329 = vperm.xlu0 %328, %v319
    %v330 = vpop.permute.xlu0 %329
    %333 = vset.pattern.permute.xlu0 0
    %334 = vperm.xlu0 %333, %v320
    %v335 = vpop.permute.xlu0 %334
    %338 = vset.pattern.permute.xlu0 0
    %339 = vperm.xlu0 %338, %v321
    %v340 = vpop.permute.xlu0 %339
    %343 = vset.pattern.permute.xlu0 0
    %344 = vperm.xlu0 %343, %v322
    %v345 = vpop.permute.xlu0 %344
    %348 = vset.pattern.permute.xlu0 0
    %349 = vperm.xlu0 %348, %v323
    %v350 = vpop.permute.xlu0 %349
    %353 = vset.pattern.permute.xlu0 0
    %354 = vperm.xlu0 %353, %v324
    %v355 = vpop.permute.xlu0 %354
    %358 = vset.pattern.permute.xlu0 0
    %359 = vperm.xlu0 %358, %v325
    %v360 = vpop.permute.xlu0 %359
    %363 = vset.pattern.permute.xlu0 0
    %364 = vperm.xlu0 %363, %v326
    %v365 = vpop.permute.xlu0 %364
    %v367 = vmul.f32 %v281, %v330
    %v368 = vmul.f32 %v286, %v335
    %v369 = vmul.f32 %v291, %v340
    %v370 = vmul.f32 %v296, %v345
    %v371 = vmul.f32 %v301, %v350
    %v372 = vmul.f32 %v306, %v355
    %v373 = vmul.f32 %v311, %v360
    %v374 = vmul.f32 %v316, %v365
    %vm375 = vcmask 64512
    %v376 = vsel %vm375, %v367, 0.0
    %v377 = vsel %vm375, %v368, 0.0
    %v378 = vadd.f32 %v376, %v377
    %v379 = vsel %vm375, %v369, 0.0
    %v380 = vadd.f32 %v378, %v379
    %v381 = vsel %vm375, %v370, 0.0
    %v382 = vadd.f32 %v380, %v381
    %v383 = vsel %vm375, %v371, 0.0
    %v384 = vadd.f32 %v382, %v383
    %v385 = vsel %vm375, %v372, 0.0
    %v386 = vadd.f32 %v384, %v385
    %v387 = vsel %vm375, %v373, 0.0
    %v388 = vadd.f32 %v386, %v387
    %v389 = vsel %vm375, %v374, 0.0
    %v390 = vadd.f32 %v388, %v389
    %v391 = vrot.slane %v390, 4
    %v392 = vadd.f32 %v390, %v391
    %v393 = vrot.slane %v392, 2
    %v394 = vadd.f32 %v392, %v393
    %v395 = vrot.slane %v394, 1
    %v396 = vadd.f32 %v394, %v395
    %v397 = vld [vmem:[#allocation2] sm:$0x1]
    %s398 = vtos %v397
    %v399 = vstv %s398
    %v400 = vadd.f32 %v396, %v399
    %v401 = vxor.u32 %v400, 2147483648
    %v402 = vmul.f32 %v401, 1.442695
    %v403 = vpow.pop %v402
    %v404 = vadd.f32 %v403, 1.0
    %v405 = vrcp.pop %v404
    %v406 = vmul.f32 1.0, %v405
    %vm407 = vcmask 57344
    %408 = vst.msk [vmem:[#allocation6] sm:$0x1] %vm407, %v406
    // Predicated region
    $region22: #{tpu_custom_call.1} parent=1 // pred_check
      _
    $region23: #{tpu_custom_call.1} parent=1 // pred_check_branch
      %410 = sbr.rel (0) target = $region25
    $region24: #{tpu_custom_call.1} parent=1 // pred_region
      %s412 = ssub.s32 16, 16
      %413 = vsyncadd [#allocation5], %s412
      %s415 = sshll.u32 [#allocation6], 4
      %s416 = int_to_ptr.vmem [resolvable:$true] %s415
      %418 = dma.vmem_to_hbm [thread:$0]  %s416, 16, %s4, [#allocation5]
    $region25: #{tpu_custom_call.1} parent=1 // pred_fallthru
      _
    // Predicated region
    $region26: #{tpu_custom_call.1} parent=1 // pred_check
      _
    $region27: #{tpu_custom_call.1} parent=1 // pred_check_branch
      %420 = sbr.rel (0) target = $region29
    $region28: #{tpu_custom_call.1} parent=1 // pred_region
      %421 = dma.done [#allocation5], 16
    $region29: #{tpu_custom_call.1} parent=1 // pred_fallthru
      _
    %422 = vsyncpa [#allocation4], 1
    %423 = vsyncpa [#allocation5], 1

</llo_original>
